<compile_context>
chip_gen: v6e
topology: v6e:2x2x1
jax: 0.10.0
libtpu: 0.0.40
codegen_flags: <defaults>
</compile_context>

<pallas_src>
import jax
import jax.numpy as jnp
from jax.experimental import pallas as pl
from jax.experimental.pallas import tpu as pltpu


def _patch_embed_kernel(p_ref, w_ref, b_ref, o_ref):
    # p_ref: (TM, K) patch tile; w_ref: (K, N) resident weight; b_ref: (1, N) f32 bias.
    acc = jnp.dot(p_ref[...], w_ref[...], preferred_element_type=jnp.float32)
    o_ref[...] = (acc + b_ref[...]).astype(o_ref.dtype)


def _pick_tm(M, compute_itemsize):
    """M-tile: big enough to amortize per-step overhead (~0.35us/step), and >=2
    tiles when possible so the parallel grid axis can split across 2 TensorCores."""
    target = 1024 if compute_itemsize <= 2 else 512
    if M > target:
        return target                  # multiple of 8; partial last tile is masked
    if M >= 16 and M % 16 == 0:
        return M // 2                  # two full tiles for megacore
    return M                           # single full-extent tile (always legal)


def patch_embeddings(x, weight, bias, patch_size, *,
                     compute_dtype=jnp.bfloat16, out_dtype=None):
    """Equivalent of PatchEmbeddings.forward.

    x:      (B, C, H, W)       NCHW, like PyTorch
    weight: (hidden, C, P, P)  nn.Conv2d.weight layout
    bias:   (hidden,)          nn.Conv2d.bias
    compute_dtype: MXU input dtype (default bf16, f32 accumulation).  Use
        jnp.float32 for exact parity with the f32 PyTorch module.
    out_dtype: output dtype (default x.dtype); pass jnp.bfloat16 if the rest of
        the ViT consumes bf16 activations (halves the output HBM write).
    returns (B, num_patches, hidden)
    """
    B, C, H, W = x.shape
    P = patch_size
    hidden = weight.shape[0]
    nh, nw = H // P, W // P
    num_patches = nh * nw
    if out_dtype is None:
        out_dtype = x.dtype

    M = B * num_patches
    K = C * P * P
    N = hidden

    comp_bytes = jnp.dtype(compute_dtype).itemsize
    out_bytes = jnp.dtype(out_dtype).itemsize

    # --- glue: im2col of non-overlapping patches (conv stride == kernel size). ---
    # reshape + transpose + cast fuse into one XLA copy; (c, p, q) flattening order
    # matches weight.reshape(hidden, C*P*P) below.
    patches = x.reshape(B, C, nh, P, nw, P)
    patches = patches.transpose(0, 2, 4, 1, 3, 5).reshape(M, K).astype(compute_dtype)

    w2d = weight.reshape(hidden, K).T.astype(compute_dtype)   # (K, N), resident
    b2d = bias.astype(jnp.float32).reshape(1, N)               # f32 bias add

    TM = _pick_tm(M, comp_bytes)
    grid = (pl.cdiv(M, TM),)

    # VMEM budget: double-buffered patch + output tiles, resident weight + bias
    # (counted x2 for safety), plus headroom.  Capped at v7x's 64 MiB physical VMEM.
    need = (2 * TM * K * comp_bytes + 2 * TM * N * out_bytes
            + 2 * (K * N * comp_bytes + N * 4))
    vmem_limit = min(max(int(need * 1.25) + (2 << 20), 32 << 20), 64 << 20)

    cost = pl.CostEstimate(
        flops=2 * M * K * N,
        transcendentals=0,
        bytes_accessed=M * K * comp_bytes + K * N * comp_bytes + M * N * out_bytes,
    )

    # Only allow an XLA producer to fuse into the patches DMA when there is no
    # partial last M tile (so fused producers never see out-of-range block rows).
    fusion = [True, False, False] if (M % TM == 0) else None

    out = pl.pallas_call(
        _patch_embed_kernel,
        out_shape=jax.ShapeDtypeStruct((M, N), out_dtype),
        grid=grid,
        in_specs=[
            pl.BlockSpec((TM, K), lambda i: (i, 0)),   # patch tile (pipelined)
            pl.BlockSpec((K, N), lambda i: (0, 0)),    # weight: fetched once, resident
            pl.BlockSpec((1, N), lambda i: (0, 0)),    # bias:   fetched once, resident
        ],
        out_specs=pl.BlockSpec((TM, N), lambda i: (i, 0)),
        compiler_params=pltpu.CompilerParams(
            dimension_semantics=("parallel",),
            vmem_limit_bytes=vmem_limit,
            allow_input_fusion=fusion,
        ),
        cost_estimate=cost,
    )(patches, w2d, b2d)

    return out.reshape(B, num_patches, hidden)


if __name__ == "__main__":
    # Small shapes consistent with the module.
    image_size = 16
    patch_size = 4
    in_channels = 4
    hidden_size = 32
    batch = 2
    num_patches = (image_size // patch_size) ** 2  # 16

    key = jax.random.PRNGKey(0)
    kx, kw, kb = jax.random.split(key, 3)

    x = jax.random.normal(
        kx, (batch, in_channels, image_size, image_size), dtype=jnp.float32)
    weight = 0.02 * jax.random.normal(
        kw, (hidden_size, in_channels, patch_size, patch_size), dtype=jnp.float32)
    bias = 0.01 * jax.random.normal(kb, (hidden_size,), dtype=jnp.float32)

    # Pure-JAX reference: stride-P conv as im2col matmul (f32).
    nh = image_size // patch_size
    p = x.reshape(batch, in_channels, nh, patch_size, nh, patch_size)
    p = p.transpose(0, 2, 4, 1, 3, 5).reshape(
        batch, num_patches, in_channels * patch_size * patch_size)
    ref = p @ weight.reshape(hidden_size, -1).T + bias[None, None, :]

    # Default path: bf16 MXU compute, f32 accumulation — loose check.
    out_bf16 = jax.block_until_ready(patch_embeddings(x, weight, bias, patch_size))
    assert out_bf16.shape == (batch, num_patches, hidden_size)
    assert out_bf16.dtype == x.dtype
    assert jnp.allclose(out_bf16, ref, atol=3e-2, rtol=3e-2)

    # f32 compute path — tight check (bit-level parity with the f32 module).
    out_f32 = jax.block_until_ready(
        patch_embeddings(x, weight, bias, patch_size, compute_dtype=jnp.float32))
    assert out_f32.shape == (batch, num_patches, hidden_size)
    assert jnp.allclose(out_f32, ref, atol=1e-4, rtol=1e-4)

    # bf16 output variant (for bf16 downstream activations).
    out_b16o = jax.block_until_ready(
        patch_embeddings(x, weight, bias, patch_size, out_dtype=jnp.bfloat16))
    assert out_b16o.dtype == jnp.bfloat16
    assert jnp.allclose(out_b16o.astype(jnp.float32), ref, atol=5e-2, rtol=5e-2)

    print("KERNEL_OK")
</pallas_src>

<mosaic_0001>
module attributes {stable_mosaic.version = 11 : i64} {
  func.func @_patch_embed_kernel(%arg0: i32, %arg1: memref<16x64xbf16, #tpu.memory_space<vmem>>, %arg2: memref<64x32xbf16, #tpu.memory_space<vmem>>, %arg3: memref<1x32xf32, #tpu.memory_space<vmem>>, %arg4: memref<16x32xf32, #tpu.memory_space<vmem>>) attributes {dimension_semantics = [#tpu.dimension_semantics<parallel>], iteration_bounds = array<i64: 2>, scalar_prefetch = 0 : i64, scratch_operands = 0 : i64, tpu.core_type = #tpu.core_type<tc>, window_params = [{transform_indices = @transform_0, window_bounds = array<i64: 16, 64>}, {pipeline_mode = #tpu.pipeline_mode<synchronous>, transform_indices = @transform_1, window_bounds = array<i64: 64, 32>}, {pipeline_mode = #tpu.pipeline_mode<synchronous>, transform_indices = @transform_2, window_bounds = array<i64: 1, 32>}, {transform_indices = @transform_3, window_bounds = array<i64: 16, 32>}]} {
    %c0 = arith.constant 0 : index
    %c0_0 = arith.constant 0 : index
    %0 = vector.load %arg1[%c0, %c0_0] : memref<16x64xbf16, #tpu.memory_space<vmem>>, vector<16x64xbf16>
    %c0_1 = arith.constant 0 : index
    %c0_2 = arith.constant 0 : index
    %1 = vector.load %arg2[%c0_1, %c0_2] : memref<64x32xbf16, #tpu.memory_space<vmem>>, vector<64x32xbf16>
    %cst = arith.constant dense<0.000000e+00> : vector<16x32xf32>
    %2 = tpu.matmul %0, %1, %cst {dimension_numbers = #tpu.dot_dimension_numbers<[1], [0], [0], [1], [0, 0, 1, 1], [], []>} : vector<16x64xbf16>, vector<64x32xbf16>, vector<16x32xf32> -> vector<16x32xf32>
    %c0_3 = arith.constant 0 : index
    %c0_4 = arith.constant 0 : index
    %3 = vector.load %arg3[%c0_3, %c0_4] : memref<1x32xf32, #tpu.memory_space<vmem>>, vector<1x32xf32>
    %4 = vector.broadcast %3 : vector<1x32xf32> to vector<16x32xf32>
    %5 = arith.addf %2, %4 : vector<16x32xf32>
    %c0_5 = arith.constant 0 : index
    %c0_6 = arith.constant 0 : index
    %6 = vector.load %arg4[%c0_5, %c0_6] : memref<16x32xf32, #tpu.memory_space<vmem>>, vector<16x32xf32>
    tpu.vector_store %arg4[%c0_5, %c0_6], %5 {strides = array<i32>} : memref<16x32xf32, #tpu.memory_space<vmem>>, vector<16x32xf32>,
    return
  }
  func.func @transform_0(%arg0: i32) -> (i32, i32) {
    %c0_i32 = arith.constant 0 : i32
    %c0_i32_0 = arith.constant 0 : i32
    return %arg0, %c0_i32 : i32, i32
  }
  func.func @transform_1(%arg0: i32) -> (i32, i32) {
    %c0_i32 = arith.constant 0 : i32
    %c0_i32_0 = arith.constant 0 : i32
    %c0_i32_1 = arith.constant 0 : i32
    return %c0_i32, %c0_i32_0 : i32, i32
  }
  func.func @transform_2(%arg0: i32) -> (i32, i32) {
    %c0_i32 = arith.constant 0 : i32
    %c0_i32_0 = arith.constant 0 : i32
    %c0_i32_1 = arith.constant 0 : i32
    return %c0_i32, %c0_i32_0 : i32, i32
  }
  func.func @transform_3(%arg0: i32) -> (i32, i32) {
    %c0_i32 = arith.constant 0 : i32
    %c0_i32_0 = arith.constant 0 : i32
    return %arg0, %c0_i32 : i32, i32
  }
}

</mosaic_0001>

<llo_original>
// kernel: tpu_custom_call.1
$region0: #{tpu_custom_call.1}
  #allocation0 [shape = 'u32[]', space=smem, size = 0x4, offset = 0x4, fixed_abs, tag = 'smem constant byte address 0x4 - core index']
  #allocation1 [shape = 'u32[144,128]{1,0:T(1,128)}', space=vmem, size = 0x12000, scoped, tag = 'internal scratch']
  %s0 = inlined_call_operand.vmem [shape: bf16[32,64], index: 0, kind: input, shape index: {}]
  %s1 = inlined_call_operand.vmem [shape: bf16[64,32], index: 1, kind: input, shape index: {}]
  %s2 = inlined_call_operand.vmem [shape: f32[1,32], index: 2, kind: input, shape index: {}]
  %s3 = inlined_call_operand.hbm [shape: f32[32,32], index: 3, kind: output, shape index: {}]
  %s4 = sld [smem:[#allocation0]]
  $region45: #{tpu_custom_call.1} parent=0
    _
  %s6 = ssub.s32 1, %s4
  %s7 = scalar_select 0, %s6, %s4
  $region1: #{tpu_custom_call.1} parent=0
    #allocation2 [shape = 'u8[16384]{0}', space=vmem, size = 0x4000, scoped, tag = 'output window, operand 0']
    #allocation3 [shape = 's32[2]{0}', space=sflag, size = 0x8, scoped, tag = 'scoped memory for tpu_custom_call.1']
    %8 = vsyncpa [#allocation3], 0
    %s9 = scalar_lea.sflag [#allocation3], 1
    %10 = vsyncpa %s9, 0
    loop: start=0, step=1, limit=4
    $region2: #{tpu_custom_call.1} parent=1 // loop_pre_header
      _
    $region3: #{tpu_custom_call.1} parent=1 // loop_header
      %s12 = sphi 0, %s16
      %p13 = scmp.ge.s32.totalorder %s12, 4
      %s22 = sphi 0, %s24
      %s25 = sphi 0, %s22
      %s26 = sphi 0, %s25
      %s42 = sphi 0, %s26
      %s46 = sphi 0, %s46
      %s48 = sphi 0, %s46
      %s49 = sphi 0, %s48
      %s63 = sphi 0, %s49
      %s67 = sphi 0, %s67
      %s69 = sphi 0, %s67
      %s70 = sphi 0, %s69
      %s84 = sphi 0, %s70
      %s90 = sphi 0, %s92
      %s93 = sphi 0, %s90
      %s94 = sphi 0, %s93
      %s110 = sphi 0, %s94
    $region4: #{tpu_custom_call.1} parent=1 // loop_header_branch
      %15 = sbr.rel (%p13) target = $region8
    $region5: #{tpu_custom_call.1} parent=1 // loop_body
      %s17 = ssub.s32 %s12, 1
      %s18 = ssub.s32 %s12, 2
      %s19 = sadd.s32 %s12, 1
      %s20 = ssub.s32 %s12, %s19
      %p21 = scmp.eq.s32.totalorder %s20, 0
      %s23 = sadd.s32 %s22, 1
      %s24 = scalar_select %p21, %s22, %s23
      %p27 = pneg %p21
      %p28 = scmp.eq.s32.totalorder %s12, 1
      %p29 = por %p27, %p28
      %p30 = scmp.ne.s32.totalorder %s22, %s25
      %p31 = scmp.eq.s32.totalorder %s12, 0
      %p32 = por %p30, %p31
      %p33 = scmp.ne.s32.totalorder %s22, %s25
      %p34 = scmp.eq.s32.totalorder %s17, 1
      %p35 = por %p33, %p34
      %p36 = scmp.ne.s32.totalorder %s25, %s26
      %p37 = scmp.eq.s32.totalorder %s17, 0
      %p38 = por %p36, %p37
      %p39 = scmp.ne.s32.totalorder %s25, %s26
      %p40 = scmp.eq.s32.totalorder %s18, 1
      %p41 = por %p39, %p40
      %p43 = scmp.ne.s32.totalorder %s26, %s42
      %p44 = scmp.eq.s32.totalorder %s18, 0
      %p45 = por %p43, %p44
      %s47 = sadd.s32 %s46, 1
      %p50 = scmp.eq.s32.totalorder %s12, 1
      %p51 = scmp.ne.s32.totalorder %s46, %s48
      %p52 = scmp.eq.s32.totalorder %s12, 0
      %p53 = por %p51, %p52
      %p54 = scmp.ne.s32.totalorder %s46, %s48
      %p55 = scmp.eq.s32.totalorder %s17, 1
      %p56 = por %p54, %p55
      %p57 = scmp.ne.s32.totalorder %s48, %s49
      %p58 = scmp.eq.s32.totalorder %s17, 0
      %p59 = por %p57, %p58
      %p60 = scmp.ne.s32.totalorder %s48, %s49
      %p61 = scmp.eq.s32.totalorder %s18, 1
      %p62 = por %p60, %p61
      %p64 = scmp.ne.s32.totalorder %s49, %s63
      %p65 = scmp.eq.s32.totalorder %s18, 0
      %p66 = por %p64, %p65
      %s68 = sadd.s32 %s67, 1
      %p71 = scmp.eq.s32.totalorder %s12, 1
      %p72 = scmp.ne.s32.totalorder %s67, %s69
      %p73 = scmp.eq.s32.totalorder %s12, 0
      %p74 = por %p72, %p73
      %p75 = scmp.ne.s32.totalorder %s67, %s69
      %p76 = scmp.eq.s32.totalorder %s17, 1
      %p77 = por %p75, %p76
      %p78 = scmp.ne.s32.totalorder %s69, %s70
      %p79 = scmp.eq.s32.totalorder %s17, 0
      %p80 = por %p78, %p79
      %p81 = scmp.ne.s32.totalorder %s69, %s70
      %p82 = scmp.eq.s32.totalorder %s18, 1
      %p83 = por %p81, %p82
      %p85 = scmp.ne.s32.totalorder %s70, %s84
      %p86 = scmp.eq.s32.totalorder %s18, 0
      %p87 = por %p85, %p86
      %s88 = ssub.s32 %s12, %s19
      %p89 = scmp.eq.s32.totalorder %s88, 0
      %s91 = sadd.s32 %s90, 1
      %s92 = scalar_select %p89, %s90, %s91
      %p95 = pneg %p89
      %p96 = scmp.eq.s32.totalorder %s12, 1
      %p97 = por %p95, %p96
      %p98 = scmp.ne.s32.totalorder %s90, %s93
      %p99 = scmp.eq.s32.totalorder %s12, 0
      %p100 = por %p98, %p99
      %p101 = scmp.ne.s32.totalorder %s90, %s93
      %p102 = scmp.eq.s32.totalorder %s17, 1
      %p103 = por %p101, %p102
      %p104 = scmp.ne.s32.totalorder %s93, %s94
      %p105 = scmp.eq.s32.totalorder %s17, 0
      %p106 = por %p104, %p105
      %p107 = scmp.ne.s32.totalorder %s93, %s94
      %p108 = scmp.eq.s32.totalorder %s18, 1
      %p109 = por %p107, %p108
      %p111 = scmp.ne.s32.totalorder %s94, %s110
      %p112 = scmp.eq.s32.totalorder %s18, 0
      %p113 = por %p111, %p112
      %p114 = scmp.le.s32.totalorder 1, %s12
      %p115 = scmp.lt.s32.totalorder %s12, 3
      %p116 = pnand %p114, %p115
      %p117 = pneg %p116
      // Predicated region
      $region9: #{tpu_custom_call.1} parent=5 // pred_check
        _
      $region10: #{tpu_custom_call.1} parent=5 // pred_check_branch
        %119 = sbr.rel (%p116) target = $region12
      $region11: #{tpu_custom_call.1} parent=5 // pred_region
        %s120 = ssub.s32 %s12, 1
        // Predicated region
        $region13: #{tpu_custom_call.1} parent=11 // pred_check
          %p121 = pneg %p59
        $region14: #{tpu_custom_call.1} parent=11 // pred_check_branch
          %123 = sbr.rel (%p121) target = $region16
        $region15: #{tpu_custom_call.1} parent=11 // pred_region
          _
        $region16: #{tpu_custom_call.1} parent=11 // pred_fallthru
          _
        // Predicated region
        $region17: #{tpu_custom_call.1} parent=11 // pred_check
          %p124 = pneg %p80
        $region18: #{tpu_custom_call.1} parent=11 // pred_check_branch
          %126 = sbr.rel (%p124) target = $region20
        $region19: #{tpu_custom_call.1} parent=11 // pred_region
          _
        $region20: #{tpu_custom_call.1} parent=11 // pred_fallthru
          _
      $region12: #{tpu_custom_call.1} parent=5 // pred_fallthru
        _
      %p127 = scmp.lt.s32.totalorder %s12, 2
      // Predicated region
      $region21: #{tpu_custom_call.1} parent=5 // pred_check
        %p128 = pneg %p127
      $region22: #{tpu_custom_call.1} parent=5 // pred_check_branch
        %130 = sbr.rel (%p128) target = $region24
      $region23: #{tpu_custom_call.1} parent=5 // pred_region
        // Predicated region
        $region25: #{tpu_custom_call.1} parent=23 // pred_check
          %p131 = pneg %p32
        $region26: #{tpu_custom_call.1} parent=23 // pred_check_branch
          %133 = sbr.rel (%p131) target = $region28
        $region27: #{tpu_custom_call.1} parent=23 // pred_region
          %s134 = smul.u32 2, %s12
          %p135 = scmp.lt.s32.totalorder %s134, 3
          %s136 = scalar_select %p135, %s134, 3
          %s137 = smul.addr %s136, 4
          %s138 = scalar_lea.vmem %s0, %s137
          %s139 = smul.u32 2, %s12
        $region28: #{tpu_custom_call.1} parent=23 // pred_fallthru
          _
      $region24: #{tpu_custom_call.1} parent=5 // pred_fallthru
        _
      %p140 = scmp.le.s32.totalorder 1, %s12
      %p141 = scmp.lt.s32.totalorder %s12, 3
      %p142 = pnand %p140, %p141
      %p143 = pneg %p142
      // Predicated region
      $region29: #{tpu_custom_call.1} parent=5 // pred_check
        _
      $region30: #{tpu_custom_call.1} parent=5 // pred_check_branch
        %145 = sbr.rel (%p142) target = $region32
      $region31: #{tpu_custom_call.1} parent=5 // pred_region
        %s146 = ssub.s32 %s12, 1
        %s147 = smul.u32 2, %s17
        %p148 = scmp.lt.s32.totalorder %s147, 3
        %s149 = scalar_select %p148, %s147, 3
        %s150 = smul.addr %s149, 4
        %s151 = scalar_lea.vmem %s0, %s150
        %p152 = pneg %p38
        %p153 = pneg %p35
        %p154 = pneg %p59
        %p155 = pneg %p56
        %p156 = pneg %p80
        %p157 = pneg %p77
        %p158 = pneg %p106
        %p159 = pneg %p103
        %s160 = sand.u32 %s93, 1
        %s161 = scalar_lea.sflag [#allocation3], %s160
        %s162 = sand.u32 %s93, 1
        %s163 = smul.addr %s162, 16
        %s164 = scalar_lea.vmem [#allocation2], %s163
        %s165 = smul.u32 2, %s17
        %p166 = scmp.lt.s32.totalorder %s165, 3
        %s167 = scalar_select %p166, %s165, 3
        %s168 = smul.addr %s167, 4
        %s169 = scalar_lea.vmem %s0, %s168
        %s170 = smul.u32 2, %s17
        %s171 = smul.u32 2, %s17
        %v173 = vld [vmem:[%s169] sm:$0xf]
        %v174 = vld [vmem:[%s169 + $0x4] sm:$0xf]
        %v175 = vld [vmem:[%s1] sm:$0xf]
        %v176 = vld [vmem:[%s1 + $0x4] sm:$0xf]
        %v177 = vld [vmem:[%s1 + $0x8] sm:$0xf]
        %v178 = vld [vmem:[%s1 + $0xc] sm:$0xf]
        %v179 = vld [vmem:[%s1 + $0x10] sm:$0xf]
        %v180 = vld [vmem:[%s1 + $0x14] sm:$0xf]
        %v181 = vld [vmem:[%s1 + $0x18] sm:$0xf]
        %v182 = vld [vmem:[%s1 + $0x1c] sm:$0xf]
        %v183 = vld [vmem:[%s2] sm:$0x1]
        %v185 = vlaneseq
        %v186 = vshrl.u32 %v185, 7
        %v187 = vsub.s32 0, %v186
        %v188 = vrot.slane %v183, %v187
        %v192 = vunpack.c.l.b16 %v173
        %v193 = vunpack.c.l.b16 %v174
        %v194 = vpack.c.b16 %v193, %v192
        %v203 = vunpack.c.l.b16 %v175
        %v204 = vunpack.c.l.b16 %v176
        %v205 = vunpack.c.l.b16 %v177
        %v206 = vunpack.c.l.b16 %v178
        %v207 = vunpack.c.l.b16 %v179
        %v208 = vunpack.c.l.b16 %v180
        %v209 = vunpack.c.l.b16 %v181
        %v210 = vunpack.c.l.b16 %v182
        %v211 = vpack.c.b16 %v204, %v203
        %v212 = vpack.c.b16 %v206, %v205
        %v213 = vpack.c.b16 %v208, %v207
        %v214 = vpack.c.b16 %v210, %v209
        %vm219 = vcmask 523264
        %v221 = vsel %vm219, %v194, 0
        %223 = vmatprep.subr.bf16.mxu0 0
        %224 = vmatpush1.bf16.msra.mxu0 0
        %225 = vmatprep.subr.bf16.mxu0 0
        %226 = vmatpush1.bf16.msra.mxu0 0
        %227 = vmatprep.subr.bf16.mxu0 0
        %228 = vmatpush1.bf16.msra.mxu0 0
        %229 = vmatprep.subr.bf16.mxu0 0
        %230 = vmatpush1.bf16.msra.mxu0 0
        %231 = vmatprep.subr.bf16.mxu0 0
        %232 = vmatpush1.bf16.msra.mxu0 %v214
        %233 = vmatprep.subr.bf16.mxu0 0
        %234 = vmatpush1.bf16.msra.mxu0 %v213
        %235 = vmatprep.subr.bf16.mxu0 0
        %236 = vmatpush1.bf16.msra.mxu0 %v212
        %237 = vmatprep.subr.bf16.mxu0 0
        %238 = vmatpush1.bf16.msra.mxu0 %v211
        %239 = vmatprep.subr.bf16.mxu0 0
        %240 = vmatpush2.bf16.msra.mxu0 0
        %241 = vmatprep.subr.bf16.mxu0 0
        %242 = vmatpush2.bf16.msra.mxu0 0
        %243 = vmatprep.subr.bf16.mxu0 0
        %244 = vmatpush2.bf16.msra.mxu0 0
        %245 = vmatprep.subr.bf16.mxu0 0
        %246 = vmatpush2.bf16.msra.mxu0 0
        %247 = vmatprep.subr.bf16.mxu0 0
        %248 = vmatpush2.bf16.msra.mxu0 0
        %249 = vmatprep.subr.bf16.mxu0 0
        %250 = vmatpush2.bf16.msra.mxu0 0
        %251 = vmatprep.subr.bf16.mxu0 0
        %252 = vmatpush2.bf16.msra.mxu0 0
        %253 = vmatprep.subr.bf16.mxu0 0
        %254 = vmatpush2.bf16.msra.mxu0 0
        %255 = vmatprep.mubr.bf16.mxu0 0
        %256 = vmatmul.mubr.bf16.gmra.mxu0 %v221
        %v257 = vpop.f32.mrf.mxu0
        %v258 = vadd.f32 %v188, %v257
        %v259 = vpop.f32.mrf.mxu0
        %v260 = vpop.f32.mrf.mxu0
        %v261 = vadd.f32 %v188, %v260
        %v262 = vpop.f32.mrf.mxu0
        %263 = vdwg.mxu0
        %vm264 = vcmask 261120
        %265 = vst.msk [vmem:[%s164] sm:$0xff] %vm264, %v258
        %266 = vst.msk [vmem:[%s164 + $0x8] sm:$0xff] %vm264, %v261
        %s267 = sand.u32 %s93, 1
        %s268 = scalar_lea.sflag [#allocation3], %s267
        %s269 = sand.u32 %s93, 1
        %s270 = smul.addr %s269, 16
        %s271 = scalar_lea.vmem [#allocation2], %s270
        // Predicated region
        $region33: #{tpu_custom_call.1} parent=31 // pred_check
          %p272 = pneg %p103
        $region34: #{tpu_custom_call.1} parent=31 // pred_check_branch
          %274 = sbr.rel (%p272) target = $region36
        $region35: #{tpu_custom_call.1} parent=31 // pred_region
          %s275 = smul.u32 2, %s17
          %s277 = ssub.s32 256, 256
          %278 = vsyncadd %s268, %s277
          %s279 = smul.addr %s275, 128
          %s280 = scalar_lea.hbm %s3, %s279
          %s281 = sshll.u32 %s271, 4
          %s282 = int_to_ptr.vmem [resolvable:$true] %s281
          %287 = dma.vmem_to_hbm [thread:$0]  %s282, 256, %s280, %s268, 128, 128, 8
        $region36: #{tpu_custom_call.1} parent=31 // pred_fallthru
          _
      $region32: #{tpu_custom_call.1} parent=5 // pred_fallthru
        _
      %p288 = scmp.le.s32.totalorder 2, %s12
      // Predicated region
      $region37: #{tpu_custom_call.1} parent=5 // pred_check
        %p289 = pneg %p288
      $region38: #{tpu_custom_call.1} parent=5 // pred_check_branch
        %291 = sbr.rel (%p289) target = $region40
      $region39: #{tpu_custom_call.1} parent=5 // pred_region
        %s292 = ssub.s32 %s12, 2
        // Predicated region
        $region41: #{tpu_custom_call.1} parent=39 // pred_check
          %p293 = pneg %p109
        $region42: #{tpu_custom_call.1} parent=39 // pred_check_branch
          %295 = sbr.rel (%p293) target = $region44
        $region43: #{tpu_custom_call.1} parent=39 // pred_region
          %s296 = sand.u32 %s94, 1
          %s297 = scalar_lea.sflag [#allocation3], %s296
          %s298 = sand.u32 %s94, 1
          %s299 = smul.addr %s298, 16
          %s300 = scalar_lea.vmem [#allocation2], %s299
          %301 = dma.done %s297, 256
        $region44: #{tpu_custom_call.1} parent=39 // pred_fallthru
          _
      $region40: #{tpu_custom_call.1} parent=5 // pred_fallthru
        _
    $region6: #{tpu_custom_call.1} parent=1 // loop_footer
      %s16 = sadd.s32 1, %s12
    $region7: #{tpu_custom_call.1} parent=1 // loop_footer_branch
      %11 = sbr.rel target = $region3
    $region8: #{tpu_custom_call.1} parent=1 // loop_exit
      _
    %302 = vsyncpa [#allocation3], 1
    %s303 = scalar_lea.sflag [#allocation3], 1
    %304 = vsyncpa %s303, 1

</llo_original>
